<compile_context>
chip_gen: v5e
topology: v5e:2x2
jax: 0.10.0
libtpu: 0.0.40
codegen_flags: <defaults>
</compile_context>

<pallas_src>
import functools

import jax
import jax.numpy as jnp
from jax.experimental import pallas as pl
from jax.experimental.pallas import tpu as pltpu


def net_kernel(x_ref, w12t_ref, w2bt_ref, o_ref):
    # x_ref:    (TB, F)          batch tile
    # w12t_ref: (F, H1 + H2)     = [W1.T | W2[:, :F].T]  (whole array, VMEM-resident)
    # w2bt_ref: (H1, H2)         = W2[:, F:].T           (whole array, VMEM-resident)
    # o_ref:    (TB, OUT_PAD)    lane-dense output tile: [x | h1 | h2 | zero-pad]
    F = x_ref.shape[1]
    H1, H2 = w2bt_ref.shape
    out_dim = F + H1 + H2
    pad = o_ref.shape[1] - out_dim  # static at trace time

    x = x_ref[...]
    xc = x.astype(w12t_ref.dtype)  # no-op when compute dtype == input dtype

    # One MXU pass for both x-side matmuls (f32 accumulation).
    y = jnp.dot(xc, w12t_ref[...], preferred_element_type=jnp.float32)  # (TB, H1+H2)
    h1 = y[:, :H1]
    # l2 without materializing out1:  h2 = x @ W2a.T + h1 @ W2b.T
    h2 = y[:, H1:] + jnp.dot(
        h1.astype(w2bt_ref.dtype), w2bt_ref[...],
        preferred_element_type=jnp.float32,
    )

    out_dtype = o_ref.dtype
    aligned = (F % 128 == 0) and (H1 % 128 == 0) and (H2 % 128 == 0) and (pad == 0)
    if aligned:
        # All lane boundaries 128-aligned -> unmasked slice stores, no shuffles.
        o_ref[:, :F] = x.astype(out_dtype)
        o_ref[:, F:F + H1] = h1.astype(out_dtype)
        o_ref[:, F + H1:] = h2.astype(out_dtype)
    else:
        # Unaligned boundaries: assemble the full lane-dense tile in registers
        # and do a single unmasked full-tile store (avoids masked vst.msk at
        # lane offsets like 32/48/56). One cast on the store path.
        pieces = [x.astype(jnp.float32), h1, h2]
        if pad > 0:
            pieces.append(jnp.zeros((x.shape[0], pad), jnp.float32))
        o_ref[...] = jnp.concatenate(pieces, axis=1).astype(out_dtype)


def prepare_params(w1, w2, compute_dtype=None):
    """One-time conversion from PyTorch nn.Linear layout to kernel layout.

    w1: (H1, F), w2: (H2, F + H1)
      -> w12t: (F, H1 + H2) = [W1.T | W2[:, :F].T]   (fused x-side weight)
         w2bt: (H1, H2)     =  W2[:, F:].T           (h1-side of layer 2)

    Call once outside the per-step forward. compute_dtype=jnp.bfloat16 targets
    the bf16 MXU on v6e/v7x (keeps f32 accumulation; loosens numerics vs the
    fp32 PyTorch reference because h1 is re-quantized before the W2b matmul).
    """
    F = w1.shape[1]
    w1t = jnp.asarray(w1).T           # (F, H1)
    w2t = jnp.asarray(w2).T           # (F + H1, H2)
    w12t = jnp.concatenate([w1t, w2t[:F, :]], axis=1)  # (F, H1 + H2)
    w2bt = w2t[F:, :]                 # (H1, H2)
    if compute_dtype is not None:
        w12t = w12t.astype(compute_dtype)
        w2bt = w2bt.astype(compute_dtype)
    return w12t, w2bt


@functools.partial(jax.jit, static_argnames=("block_b", "return_padded"))
def net_forward(x, w12t, w2bt, *, block_b=None, return_padded=False):
    """x: (B, F); weights already in kernel layout from prepare_params.

    Returns (B, F+H1+H2); with return_padded=True returns the lane-dense
    (B, round_up(F+H1+H2, 128)) slab and skips the wrapper-side slice pass.
    """
    B, F = x.shape
    H1, H2 = w2bt.shape
    assert w12t.shape == (F, H1 + H2), (w12t.shape, (F, H1 + H2))
    out_dim = F + H1 + H2
    # Pad the output lanes only when out_dim is not already 128-aligned.
    out_pad = out_dim if out_dim % 128 == 0 else ((out_dim + 127) // 128) * 128

    itemsize = jnp.dtype(x.dtype).itemsize
    w_bytes = (w12t.size + w2bt.size) * jnp.dtype(w12t.dtype).itemsize
    # TODO(synk): for very large F/H the whole-array VMEM-resident weights
    # would need a tiled reduction grid axis instead; fine for this module.

    if block_b is None:
        # Size the batch tile against VMEM: double-buffered x + out tiles must
        # stay well under v7x's 64 MiB (and under v5e/v6e's 128 MiB).
        row_bytes = 2 * (F + out_pad) * itemsize
        vmem_budget = 40 << 20
        cap = max(8, min(1024, (vmem_budget // row_bytes) // 8 * 8))
        if B > 512:
            block_b = min(512, cap)   # >=2 grid steps -> both v7x TCs get work
        else:
            block_b = min(cap, max(8, ((B + 7) // 8) * 8))

    # Ragged last block handled by Pallas (OOB rows discarded) -> no jnp.pad pass.
    grid = (pl.cdiv(B, block_b),)

    vmem_est = 2 * block_b * (F + out_pad) * itemsize + w_bytes
    vmem_limit = int(min(48 << 20, max(16 << 20, vmem_est + (4 << 20))))

    cost = pl.CostEstimate(
        flops=2 * B * (F * (H1 + H2) + H1 * H2),
        transcendentals=0,
        bytes_accessed=B * F * itemsize + w_bytes + B * out_pad * itemsize,
    )

    out = pl.pallas_call(
        net_kernel,
        out_shape=jax.ShapeDtypeStruct((B, out_pad), x.dtype),
        grid=grid,
        in_specs=[
            pl.BlockSpec((block_b, F), lambda i: (i, 0)),
            # Grid-invariant weights: whole array, single-buffered, VMEM-resident.
            pl.BlockSpec(memory_space=pltpu.MemorySpace.VMEM),
            pl.BlockSpec(memory_space=pltpu.MemorySpace.VMEM),
        ],
        out_specs=pl.BlockSpec((block_b, out_pad), lambda i: (i, 0)),
        compiler_params=pltpu.CompilerParams(
            # Independent batch tiles: shard across v7x's 2 TensorCores.
            dimension_semantics=("parallel",),
            vmem_limit_bytes=vmem_limit,
        ),
        cost_estimate=cost,
    )(x, w12t, w2bt)

    if return_padded or out_pad == out_dim:
        return out
    return out[:, :out_dim]


def _torch_linear_init(key, out_features, in_features):
    # Deterministic stand-in for nn.Linear default init: U(-1/sqrt(in), 1/sqrt(in)).
    bound = 1.0 / jnp.sqrt(jnp.float32(in_features))
    return jax.random.uniform(
        key, (out_features, in_features), jnp.float32, minval=-bound, maxval=bound
    )


if __name__ == "__main__":
    nBatch, nFeatures, nHidden1, nHidden2 = 8, 32, 16, 8

    key = jax.random.PRNGKey(0)
    kx, k1, k2 = jax.random.split(key, 3)

    x = jax.random.normal(kx, (nBatch, nFeatures), jnp.float32)
    w1 = _torch_linear_init(k1, nHidden1, nFeatures)                 # (H1, F)
    w2 = _torch_linear_init(k2, nHidden2, nFeatures + nHidden1)      # (H2, F+H1)

    # One-time weight layout conversion (compute_dtype=None -> fp32 numerics
    # matching the PyTorch reference; use jnp.bfloat16 on v6e/v7x real sizes).
    w12t, w2bt = prepare_params(w1, w2, compute_dtype=None)

    out = jax.block_until_ready(net_forward(x, w12t, w2bt))

    # Pure-JAX reference of the PyTorch forward.
    out1_ref = jnp.concatenate([x, x @ w1.T], axis=1)
    ref = jnp.concatenate([out1_ref, out1_ref @ w2.T], axis=1)

    assert out.shape == (nBatch, nFeatures + nHidden1 + nHidden2), out.shape
    assert jnp.allclose(out, ref, atol=1e-5, rtol=1e-5), "mismatch vs reference"

    print("KERNEL_OK")
</pallas_src>

<mosaic_0001>
module attributes {stable_mosaic.version = 11 : i64} {
  func.func @net_kernel(%arg0: i32, %arg1: memref<8x32xf32, #tpu.memory_space<vmem>>, %arg2: memref<32x24xf32, #tpu.memory_space<vmem>>, %arg3: memref<16x8xf32, #tpu.memory_space<vmem>>, %arg4: memref<8x128xf32, #tpu.memory_space<vmem>>) attributes {dimension_semantics = [#tpu.dimension_semantics<parallel>], iteration_bounds = array<i64: 1>, scalar_prefetch = 0 : i64, scratch_operands = 0 : i64, tpu.core_type = #tpu.core_type<tc>, window_params = [{transform_indices = @transform_0, window_bounds = array<i64: 8, 32>}, {pipeline_mode = #tpu.pipeline_mode<synchronous>, transform_indices = @transform_1, window_bounds = array<i64: 32, 24>}, {pipeline_mode = #tpu.pipeline_mode<synchronous>, transform_indices = @transform_2, window_bounds = array<i64: 16, 8>}, {transform_indices = @transform_3, window_bounds = array<i64: 8, 128>}]} {
    %c0 = arith.constant 0 : index
    %c0_0 = arith.constant 0 : index
    %0 = vector.load %arg1[%c0, %c0_0] : memref<8x32xf32, #tpu.memory_space<vmem>>, vector<8x32xf32>
    %c0_1 = arith.constant 0 : index
    %c0_2 = arith.constant 0 : index
    %1 = vector.load %arg2[%c0_1, %c0_2] : memref<32x24xf32, #tpu.memory_space<vmem>>, vector<32x24xf32>
    %cst = arith.constant dense<0.000000e+00> : vector<8x24xf32>
    %2 = tpu.matmul %0, %1, %cst {dimension_numbers = #tpu.dot_dimension_numbers<[1], [0], [0], [1], [0, 0, 1, 1], [], []>} : vector<8x32xf32>, vector<32x24xf32>, vector<8x24xf32> -> vector<8x24xf32>
    %3 = vector.extract_strided_slice %2 {offsets = [0, 0], sizes = [8, 16], strides = [1, 1]} : vector<8x24xf32> to vector<8x16xf32>
    %4 = vector.extract_strided_slice %2 {offsets = [0, 16], sizes = [8, 8], strides = [1, 1]} : vector<8x24xf32> to vector<8x8xf32>
    %c0_3 = arith.constant 0 : index
    %c0_4 = arith.constant 0 : index
    %5 = vector.load %arg3[%c0_3, %c0_4] : memref<16x8xf32, #tpu.memory_space<vmem>>, vector<16x8xf32>
    %cst_5 = arith.constant dense<0.000000e+00> : vector<8x8xf32>
    %6 = tpu.matmul %3, %5, %cst_5 {dimension_numbers = #tpu.dot_dimension_numbers<[1], [0], [0], [1], [0, 0, 1, 1], [], []>} : vector<8x16xf32>, vector<16x8xf32>, vector<8x8xf32> -> vector<8x8xf32>
    %7 = arith.addf %4, %6 : vector<8x8xf32>
    %cst_6 = arith.constant 0.000000e+00 : f32
    %8 = vector.broadcast %cst_6 : f32 to vector<8x72xf32>
    %9 = tpu.concatenate %0, %3, %7, %8 in 1 : vector<8x32xf32>, vector<8x16xf32>, vector<8x8xf32>, vector<8x72xf32> -> vector<8x128xf32>
    %c0_7 = arith.constant 0 : index
    %c0_8 = arith.constant 0 : index
    %10 = vector.load %arg4[%c0_7, %c0_8] : memref<8x128xf32, #tpu.memory_space<vmem>>, vector<8x128xf32>
    tpu.vector_store %arg4[%c0_7, %c0_8], %9 {strides = array<i32>} : memref<8x128xf32, #tpu.memory_space<vmem>>, vector<8x128xf32>,
    return
  }
  func.func @transform_0(%arg0: i32) -> (i32, i32) {
    %c0_i32 = arith.constant 0 : i32
    %c0_i32_0 = arith.constant 0 : i32
    return %arg0, %c0_i32 : i32, i32
  }
  func.func @transform_1(%arg0: i32) -> (i32, i32) {
    %c0_i32 = arith.constant 0 : i32
    %c0_i32_0 = arith.constant 0 : i32
    %c0_i32_1 = arith.constant 0 : i32
    return %c0_i32, %c0_i32_0 : i32, i32
  }
  func.func @transform_2(%arg0: i32) -> (i32, i32) {
    %c0_i32 = arith.constant 0 : i32
    %c0_i32_0 = arith.constant 0 : i32
    %c0_i32_1 = arith.constant 0 : i32
    return %c0_i32, %c0_i32_0 : i32, i32
  }
  func.func @transform_3(%arg0: i32) -> (i32, i32) {
    %c0_i32 = arith.constant 0 : i32
    %c0_i32_0 = arith.constant 0 : i32
    return %arg0, %c0_i32 : i32, i32
  }
}

</mosaic_0001>

<llo_original>
// kernel: net_forward.1
$region0: #{net_forward.1}
  #allocation0 [shape = 'u32[]', space=smem, size = 0x4, offset = 0x4, fixed_abs, tag = 'smem constant byte address 0x4 - core index']
  #allocation1 [shape = 'u32[72,128]{1,0:T(1,128)}', space=vmem, size = 0x9000, scoped, tag = 'internal scratch']
  %s0 = inlined_call_operand.vmem [shape: f32[8,32], index: 0, kind: input, shape index: {}]
  %s1 = inlined_call_operand.vmem [shape: f32[32,24], index: 1, kind: input, shape index: {}]
  %s2 = inlined_call_operand.vmem [shape: f32[16,8], index: 2, kind: input, shape index: {}]
  %s3 = inlined_call_operand.hbm [shape: f32[8,128], index: 3, kind: output, shape index: {}]
  %s4 = sld [smem:[#allocation0]]
  $region22: #{net_forward.1} parent=0
    _
  %s6 = ssub.s32 1, %s4
  %s7 = scalar_select 0, %s6, %s4
  $region1: #{net_forward.1} parent=0
    #allocation2 [shape = 'u8[4096]{0}', space=vmem, size = 0x1000, scoped, tag = 'output window, operand 0, single buffered']
    #allocation3 [shape = 's32[1]{0}', space=sflag, size = 0x4, scoped, tag = 'scoped memory for net_forward.1']
    %8 = vsyncpa [#allocation3], 0
    // Predicated region
    $region2: #{net_forward.1} parent=1 // pred_check
      _
    $region3: #{net_forward.1} parent=1 // pred_check_branch
      %10 = sbr.rel (0) target = $region5
    $region4: #{net_forward.1} parent=1 // pred_region
      _
    $region5: #{net_forward.1} parent=1 // pred_fallthru
      _
    // Predicated region
    $region6: #{net_forward.1} parent=1 // pred_check
      _
    $region7: #{net_forward.1} parent=1 // pred_check_branch
      %12 = sbr.rel (0) target = $region9
    $region8: #{net_forward.1} parent=1 // pred_region
      _
    $region9: #{net_forward.1} parent=1 // pred_fallthru
      _
    // Predicated region
    $region10: #{net_forward.1} parent=1 // pred_check
      _
    $region11: #{net_forward.1} parent=1 // pred_check_branch
      %14 = sbr.rel (0) target = $region13
    $region12: #{net_forward.1} parent=1 // pred_region
      _
    $region13: #{net_forward.1} parent=1 // pred_fallthru
      _
    %v15 = vld [vmem:[%s0] sm:$0xff]
    %v16 = vld [vmem:[%s1] sm:$0xff]
    %v17 = vld [vmem:[%s1 + $0x8] sm:$0xff]
    %v18 = vld [vmem:[%s1 + $0x10] sm:$0xff]
    %v19 = vld [vmem:[%s1 + $0x18] sm:$0xff]
    %vm20 = vcmask 261120
    %v22 = vsel %vm20, %v15, 0
    %24 = vmatpush.msra.mxu0 0.0
    %25 = vmatpush.msra.mxu0 0.0
    %26 = vmatpush.msra.mxu0 0.0
    %27 = vmatpush.msra.mxu0 0.0
    %28 = vmatpush.msra.mxu0 0.0
    %29 = vmatpush.msra.mxu0 0.0
    %30 = vmatpush.msra.mxu0 0.0
    %31 = vmatpush.msra.mxu0 0.0
    %32 = vmatpush.msra.mxu0 0.0
    %33 = vmatpush.msra.mxu0 0.0
    %34 = vmatpush.msra.mxu0 0.0
    %35 = vmatpush.msra.mxu0 0.0
    %36 = vmatpush.msra.mxu0 %v19
    %37 = vmatpush.msra.mxu0 %v18
    %38 = vmatpush.msra.mxu0 %v17
    %39 = vmatpush.msra.mxu0 %v16
    %40 = vmatmul.f32.gmra.mxu0 %v22
    %v41 = vpop.f32.mrf.mxu0
    %v42 = vadd.f32 0.0, %v41
    %43 = vdwg.mxu0
    %v44 = vld [vmem:[%s2] sm:$0xff]
    %v45 = vld [vmem:[%s2 + $0x8] sm:$0xff]
    %vm46 = vcmask 130048
    %v48 = vsel %vm46, %v42, 0
    %50 = vmatpush.msra.mxu0 0.0
    %51 = vmatpush.msra.mxu0 0.0
    %52 = vmatpush.msra.mxu0 0.0
    %53 = vmatpush.msra.mxu0 0.0
    %54 = vmatpush.msra.mxu0 0.0
    %55 = vmatpush.msra.mxu0 0.0
    %56 = vmatpush.msra.mxu0 0.0
    %57 = vmatpush.msra.mxu0 0.0
    %58 = vmatpush.msra.mxu0 0.0
    %59 = vmatpush.msra.mxu0 0.0
    %60 = vmatpush.msra.mxu0 0.0
    %61 = vmatpush.msra.mxu0 0.0
    %62 = vmatpush.msra.mxu0 0.0
    %63 = vmatpush.msra.mxu0 0.0
    %64 = vmatpush.msra.mxu0 %v45
    %65 = vmatpush.msra.mxu0 %v44
    %66 = vmatmul.f32.gmra.mxu0 %v48
    %v67 = vpop.f32.mrf.mxu0
    %v68 = vadd.f32 0.0, %v67
    %69 = vdwg.mxu0
    %71 = vrot.lane.b32.xlu0 %v68, 16
    %v72 = vpop.permute.xlu0 %71
    %v74 = vadd.f32 %v42, %v72
    %75 = vrot.lane.b32.xlu0 %v42, 32
    %v76 = vpop.permute.xlu0 %75
    %79 = vrot.lane.b32.xlu0 %v74, 32
    %v80 = vpop.permute.xlu0 %79
    %v82 = vsel %vm20, %v15, %v76
    %vm83 = vcmask 392192
    %v84 = vsel %vm83, %v82, %v80
    %vm85 = vcmask 457728
    %v86 = vsel %vm85, %v84, 0.0
    %87 = vst [vmem:[#allocation2] sm:$0xff] %v86
    // Predicated region
    $region14: #{net_forward.1} parent=1 // pred_check
      _
    $region15: #{net_forward.1} parent=1 // pred_check_branch
      %89 = sbr.rel (0) target = $region17
    $region16: #{net_forward.1} parent=1 // pred_region
      %91 = vsyncadd [#allocation3], 0
      %s93 = sshll.u32 [#allocation2], 4
      %s94 = int_to_ptr.vmem [resolvable:$true] %s93
      %s95 = sshll.u32 %s3, 4
      %s96 = int_to_ptr.hbm [resolvable:$true] %s95
      %98 = dma.vmem_to_hbm [thread:$0]  %s94, 128, %s96, [#allocation3]
    $region17: #{net_forward.1} parent=1 // pred_fallthru
      _
    // Predicated region
    $region18: #{net_forward.1} parent=1 // pred_check
      _
    $region19: #{net_forward.1} parent=1 // pred_check_branch
      %100 = sbr.rel (0) target = $region21
    $region20: #{net_forward.1} parent=1 // pred_region
      %102 = dma.done [#allocation3], 128
    $region21: #{net_forward.1} parent=1 // pred_fallthru
      _
    %103 = vsyncpa [#allocation3], 1

</llo_original>
